<compile_context>
chip_gen: v6e
topology: v6e:2x2x1
jax: 0.10.0
libtpu: 0.0.40
codegen_flags: <defaults>
</compile_context>

<pallas_src>
import functools

import jax
import jax.numpy as jnp
from jax.experimental import pallas as pl
from jax.experimental.pallas import tpu as pltpu


# Budget for the double-buffered streamed x tile (2 buffers together).  16 MiB
# keeps the pipeline inside v5e's 16 MiB default scoped VMEM and leaves ample
# headroom under the explicit 32 MiB limit below (v7x physical VMEM is 64 MiB).
_X_TILE_BUDGET_BYTES = 16 * 1024 * 1024
_VMEM_LIMIT_BYTES = 32 * 1024 * 1024
_MXU_MIN_CM = 8   # bottleneck width at which the MXU epilogue beats the VPU loop


def _pick_hw_tile(hw, c, itemsize):
    """Largest lane tile (multiple of 128) fitting the double-buffer budget."""
    if hw <= 128:
        return hw
    max_lanes = (_X_TILE_BUDGET_BYTES // (2 * c * itemsize)) // 128 * 128
    max_lanes = max(128, max_lanes)
    if hw <= max_lanes:
        return hw          # whole axis fits comfortably: single block per batch
    return max_lanes       # multiple of 128; ragged last block is masked


def _channel_gate_kernel(x_ref, p_ref, o_ref, acc_ref, *,
                         inv_hw, cm, hw_tile, total_hw, mask_last, use_mxu):
    """One (batch, hw-tile) grid step.

    x_ref   : (1, C, hw_tile)    activations (f32 or bf16), streamed tile
    p_ref   : (2*cm + 2, C) f32  packed parameters (constant block -> resident)
                [0      : cm   ]  fc0 weight rows with folded BN scale baked in
                [cm     : 2*cm ]  fc_final weight, transposed (cm, C)
                [2*cm   : +1   ]  fc_final bias (C,)
                [2*cm+1 : +2   ]  folded BN shift (first cm lanes valid)
    o_ref   : (1, 1, C) f32      per-batch channel gate (written on last step)
    acc_ref : (1, C) f32         running spatial sum (VMEM scratch, per core)
    """
    hw = pl.program_id(1)

    @pl.when(hw == 0)
    def _init():
        acc_ref[...] = jnp.zeros_like(acc_ref)

    # ---- steady state: stream a tile, accumulate its spatial partial sum ----
    x = x_ref[...].astype(jnp.float32)                      # (1, C, hw_tile)
    if mask_last:
        # Ragged last tile: zero out lanes past the true spatial extent.
        lane = jax.lax.broadcasted_iota(jnp.int32, x.shape, dimension=2)
        x = jnp.where(hw * hw_tile + lane < total_hw, x, 0.0)
    acc_ref[...] += jnp.sum(x, axis=-1)                     # (1, C)

    # ---- epilogue: bottleneck MLP + store, once per batch column ------------
    @pl.when(hw == pl.num_programs(1) - 1)
    def _epilogue():
        means = acc_ref[...] * inv_hw                       # (1, C), 1/HW once
        b2 = p_ref[2 * cm: 2 * cm + 1, :]                   # (1, C)
        if use_mxu:
            # Production-size bottleneck (Cm >= 8): two tiny MXU matmuls.
            # HIGHEST precision is free here -- this runs once per batch
            # element, entirely off the HBM-streaming critical path.
            w1 = p_ref[0:cm, :]                             # (Cm, C) scale-folded
            w2t = p_ref[cm:2 * cm, :]                       # (Cm, C)
            shift = p_ref[2 * cm + 1: 2 * cm + 2, 0:cm]     # (1, Cm)
            h = jax.lax.dot_general(
                means, w1, (((1,), (1,)), ((), ())),
                precision=jax.lax.Precision.HIGHEST,
                preferred_element_type=jnp.float32)         # (1, Cm)
            h = jnp.maximum(h + shift, 0.0)                 # BN-shift + ReLU
            gate = jax.lax.dot_general(
                h, w2t, (((1,), (0,)), ((), ())),
                precision=jax.lax.Precision.HIGHEST,
                preferred_element_type=jnp.float32) + b2    # (1, C)
        else:
            # Tiny bottleneck (Cm ~ 2): unrolled rank-1 VPU/XLU updates.
            gate = b2
            for m in range(cm):
                w1_row = p_ref[m: m + 1, :]                 # (1, C)
                w2_row = p_ref[cm + m: cm + m + 1, :]       # (1, C)
                shift_m = p_ref[2 * cm + 1: 2 * cm + 2, m: m + 1]   # (1, 1)
                hm = jnp.sum(means * w1_row, axis=-1, keepdims=True) + shift_m
                hm = jnp.maximum(hm, 0.0)                   # ReLU
                gate = gate + hm * w2_row                   # rank-1 update
        o_ref[0] = gate.astype(o_ref.dtype)


def channel_gate_scores(x, packed_params, *, hw_tile=None):
    """x: (B, C, H, W) -> (B, C) f32 channel gate (pre-broadcast).

    Fusion-friendly API: the module's expand_as is a read-side broadcast that
    should fuse into the consumer under jit rather than be written to HBM.
    """
    B, C, H, W = x.shape
    assert H == W, "ChannelGate kernel assumes square spatial input (H == W)."
    P = packed_params.shape[0]
    assert packed_params.shape == (P, C) and (P - 2) % 2 == 0
    cm = (P - 2) // 2

    HW = H * W
    x_flat = x.reshape(B, C, HW)                 # free reshape of NCHW layout
    itemsize = jnp.dtype(x_flat.dtype).itemsize

    if hw_tile is None:
        hw_tile = _pick_hw_tile(HW, C, itemsize)
    assert hw_tile == HW or hw_tile % 128 == 0
    n_hw = pl.cdiv(HW, hw_tile)
    mask_last = (HW % hw_tile) != 0

    kernel = functools.partial(
        _channel_gate_kernel,
        inv_hw=1.0 / HW, cm=cm, hw_tile=hw_tile, total_hw=HW,
        mask_last=mask_last, use_mxu=cm >= _MXU_MIN_CM)

    cost = pl.CostEstimate(
        flops=int(2 * B * C * HW + 4 * B * C * cm),
        transcendentals=0,
        bytes_accessed=int(x_flat.size * itemsize
                           + packed_params.size * 4
                           + B * C * 4))

    gate = pl.pallas_call(
        kernel,
        out_shape=jax.ShapeDtypeStruct((B, 1, C), jnp.float32),
        grid_spec=pltpu.PrefetchScalarGridSpec(
            num_scalar_prefetch=0,
            grid=(B, n_hw),                       # reduction (HW) axis last
            in_specs=[
                # Streamed activations: double-buffered (1, C, hw_tile) tiles.
                pl.BlockSpec((1, C, hw_tile), lambda b, h: (b, 0, h)),
                # Packed params: constant block index -> DMA'd once, resident.
                pl.BlockSpec((P, C), lambda b, h: (0, 0)),
            ],
            out_specs=pl.BlockSpec((1, 1, C), lambda b, h: (b, 0, 0)),
            scratch_shapes=[pltpu.VMEM((1, C), jnp.float32)],
        ),
        compiler_params=pltpu.CompilerParams(
            dimension_semantics=("parallel", "arbitrary"),
            vmem_limit_bytes=_VMEM_LIMIT_BYTES),
        cost_estimate=cost,
    )(x_flat, packed_params)

    return gate[:, 0, :]


def channel_gate_forward(x, packed_params, *, hw_tile=None):
    """Full module semantics: gate broadcast back to (B, C, H, W), dtype of x.

    NOTE: prefer channel_gate_scores() in production and let the broadcast
    fuse into the consumer; materializing it here writes B*C*H*W extra bytes.
    """
    B, C, H, W = x.shape
    gate = channel_gate_scores(x, packed_params, hw_tile=hw_tile)
    return jnp.broadcast_to(gate[:, :, None, None], (B, C, H, W)).astype(x.dtype)


def init_params(key, gate_channel, reduction_ratio=16):
    """Deterministic synthetic parameters matching the PyTorch module shapes."""
    C = gate_channel
    Cm = C // reduction_ratio
    keys = iter(jax.random.split(key, 8))

    def nrm(shape, s):
        return s * jax.random.normal(next(keys), shape, jnp.float32)

    def uni(shape, lo, hi):
        return jax.random.uniform(next(keys), shape, jnp.float32, lo, hi)

    return {
        "w1": nrm((Cm, C), 0.2),        # gate_c_fc_0.weight  (out, in)
        "b1": nrm((Cm,), 0.1),          # gate_c_fc_0.bias
        "gamma": uni((Cm,), 0.5, 1.5),  # gate_c_bn_1.weight
        "beta": nrm((Cm,), 0.1),        # gate_c_bn_1.bias
        "mean": nrm((Cm,), 0.1),        # gate_c_bn_1.running_mean
        "var": uni((Cm,), 0.5, 1.5),    # gate_c_bn_1.running_var
        "w2": nrm((C, Cm), 0.2),        # gate_c_fc_final.weight
        "b2": nrm((C,), 0.1),           # gate_c_fc_final.bias
        "eps": 1e-5,
    }


def pack_params(raw):
    """Fold inference-mode BN into fc0 and pack everything into one (2*Cm+2, C) array."""
    w1, b1 = raw["w1"], raw["b1"]
    Cm, C = w1.shape
    scale = raw["gamma"] / jnp.sqrt(raw["var"] + raw["eps"])       # (Cm,)
    shift = raw["beta"] + scale * (b1 - raw["mean"])               # (Cm,)
    w1_folded = w1 * scale[:, None]                                # (Cm, C)
    w2_t = raw["w2"].T                                             # (Cm, C)
    b2_row = raw["b2"][None, :]                                    # (1, C)
    shift_row = jnp.zeros((1, C), jnp.float32).at[0, :Cm].set(shift)
    return jnp.concatenate([w1_folded, w2_t, b2_row, shift_row], axis=0)


def channel_gate_reference(x, raw):
    """Pure-JAX reference with the full (unfolded) inference-mode BN math."""
    hi = jax.lax.Precision.HIGHEST
    avg = jnp.mean(x.astype(jnp.float32), axis=(2, 3))                       # (B, C)
    h = jnp.dot(avg, raw["w1"].T, precision=hi) + raw["b1"]                  # (B, Cm)
    h = (h - raw["mean"]) * (raw["gamma"] / jnp.sqrt(raw["var"] + raw["eps"])) + raw["beta"]
    h = jnp.maximum(h, 0.0)
    g = jnp.dot(h, raw["w2"].T, precision=hi) + raw["b2"]                    # (B, C)
    return jnp.broadcast_to(g[:, :, None, None], x.shape)


if __name__ == "__main__":
    root = jax.random.PRNGKey(0)

    # (name, B, C, H(=W), reduction_ratio, dtype, forced_hw_tile)
    cases = [
        ("tiny_f32_vpu",      2, 32,  16, 16, jnp.float32,  None),  # single tile, VPU MLP
        ("tiled_hw_f32",      2, 32,  16, 16, jnp.float32,  128),   # 2 HW tiles, accumulator
        ("mxu_ragged_hw_f32", 2, 256, 12, 16, jnp.float32,  128),   # Cm=16 MXU path + ragged mask
        ("tiled_bf16",        2, 32,  16, 16, jnp.bfloat16, 128),   # bf16 stream, f32 accumulate
    ]

    for idx, (name, B, C, H, r, dtype, hw_tile) in enumerate(cases):
        kx, kp = jax.random.split(jax.random.fold_in(root, idx))
        x = jax.random.normal(kx, (B, C, H, H), jnp.float32).astype(dtype)
        raw = init_params(kp, C, reduction_ratio=r)
        packed = pack_params(raw)

        gate = jax.block_until_ready(
            channel_gate_scores(x, packed, hw_tile=hw_tile))          # (B, C) f32
        ref = channel_gate_reference(x, raw)[:, :, 0, 0]
        err = float(jnp.max(jnp.abs(gate - ref)))
        if not err < 1e-3:
            raise AssertionError(
                f"{name}: kernel/reference mismatch, max abs err = {err}")

        if idx == 0:
            # Full module semantics (expand_as broadcast) checked once.
            out = jax.block_until_ready(
                channel_gate_forward(x, packed, hw_tile=hw_tile))
            assert out.shape == x.shape and out.dtype == x.dtype
            assert bool(jnp.all(out == gate[:, :, None, None].astype(x.dtype)))

    print("KERNEL_OK")
</pallas_src>

<mosaic_0001>
module attributes {stable_mosaic.version = 11 : i64} {
  func.func @_channel_gate_kernel(%arg0: i32, %arg1: i32, %arg2: memref<1x32x256xf32, #tpu.memory_space<vmem>>, %arg3: memref<6x32xf32, #tpu.memory_space<vmem>>, %arg4: memref<1x1x32xf32, #tpu.memory_space<vmem>>, %arg5: memref<1x32xf32, #tpu.memory_space<vmem>>) attributes {dimension_semantics = [#tpu.dimension_semantics<parallel>, #tpu.dimension_semantics<arbitrary>], iteration_bounds = array<i64: 2, 1>, scalar_prefetch = 0 : i64, scratch_operands = 1 : i64, tpu.core_type = #tpu.core_type<tc>, window_params = [{transform_indices = @transform_0, window_bounds = array<i64: 1, 32, 256>}, {pipeline_mode = #tpu.pipeline_mode<synchronous>, transform_indices = @transform_1, window_bounds = array<i64: 6, 32>}, {transform_indices = @transform_2, window_bounds = array<i64: 1, 1, 32>}]} {
    %c0_i32 = arith.constant 0 : i32
    %0 = arith.cmpi eq, %arg1, %c0_i32 : i32
    %1 = arith.extui %0 : i1 to i32
    %c0_i32_0 = arith.constant 0 : i32
    %2 = arith.cmpi ne, %1, %c0_i32_0 : i32
    scf.if %2 {
      %cst_9 = arith.constant 0.000000e+00 : f32
      %11 = vector.broadcast %cst_9 : f32 to vector<1x32xf32>
      %c0_10 = arith.constant 0 : index
      %c0_11 = arith.constant 0 : index
      %12 = vector.load %arg5[%c0_10, %c0_11] : memref<1x32xf32, #tpu.memory_space<vmem>>, vector<1x32xf32>
      tpu.vector_store %arg5[%c0_10, %c0_11], %11 {strides = array<i32>} : memref<1x32xf32, #tpu.memory_space<vmem>>, vector<1x32xf32>,
    } else {
    }
    %c0 = arith.constant 0 : index
    %c0_1 = arith.constant 0 : index
    %c0_2 = arith.constant 0 : index
    %3 = vector.load %arg2[%c0, %c0_1, %c0_2] : memref<1x32x256xf32, #tpu.memory_space<vmem>>, vector<1x32x256xf32>
    %c0_3 = arith.constant 0 : index
    %c0_4 = arith.constant 0 : index
    %4 = vector.load %arg5[%c0_3, %c0_4] : memref<1x32xf32, #tpu.memory_space<vmem>>, vector<1x32xf32>
    %cst = arith.constant dense<0.000000e+00> : vector<1x32xf32>
    %5 = vector.multi_reduction <add>, %3, %cst [2] : vector<1x32x256xf32> to vector<1x32xf32>
    %6 = arith.addf %4, %5 : vector<1x32xf32>
    %c0_5 = arith.constant 0 : index
    %c0_6 = arith.constant 0 : index
    %7 = vector.load %arg5[%c0_5, %c0_6] : memref<1x32xf32, #tpu.memory_space<vmem>>, vector<1x32xf32>
    tpu.vector_store %arg5[%c0_5, %c0_6], %6 {strides = array<i32>} : memref<1x32xf32, #tpu.memory_space<vmem>>, vector<1x32xf32>,
    %c0_i32_7 = arith.constant 0 : i32
    %8 = arith.cmpi eq, %arg1, %c0_i32_7 : i32
    %9 = arith.extui %8 : i1 to i32
    %c0_i32_8 = arith.constant 0 : i32
    %10 = arith.cmpi ne, %9, %c0_i32_8 : i32
    scf.if %10 {
      %c0_9 = arith.constant 0 : index
      %c0_10 = arith.constant 0 : index
      %11 = vector.load %arg5[%c0_9, %c0_10] : memref<1x32xf32, #tpu.memory_space<vmem>>, vector<1x32xf32>
      %cst_11 = arith.constant 3.906250e-03 : f32
      %12 = vector.broadcast %cst_11 : f32 to vector<1x32xf32>
      %13 = arith.mulf %11, %12 : vector<1x32xf32>
      %c4 = arith.constant 4 : index
      %c0_12 = arith.constant 0 : index
      %14 = vector.load %arg3[%c4, %c0_12] : memref<6x32xf32, #tpu.memory_space<vmem>>, vector<1x32xf32>
      %c0_13 = arith.constant 0 : index
      %c0_14 = arith.constant 0 : index
      %15 = vector.load %arg3[%c0_13, %c0_14] : memref<6x32xf32, #tpu.memory_space<vmem>>, vector<1x32xf32>
      %c2 = arith.constant 2 : index
      %c0_15 = arith.constant 0 : index
      %16 = vector.load %arg3[%c2, %c0_15] : memref<6x32xf32, #tpu.memory_space<vmem>>, vector<1x32xf32>
      %c5 = arith.constant 5 : index
      %c0_16 = arith.constant 0 : index
      %17 = vector.load %arg3[%c5, %c0_16] : memref<6x32xf32, #tpu.memory_space<vmem>>, vector<1x1xf32>
      %18 = arith.mulf %13, %15 : vector<1x32xf32>
      %cst_17 = arith.constant dense<0.000000e+00> : vector<1xf32>
      %19 = vector.multi_reduction <add>, %18, %cst_17 [1] : vector<1x32xf32> to vector<1xf32>
      %20 = vector.shape_cast %19 : vector<1xf32> to vector<1x1xf32>
      %21 = arith.addf %20, %17 : vector<1x1xf32>
      %cst_18 = arith.constant 0.000000e+00 : f32
      %22 = vector.broadcast %cst_18 : f32 to vector<1x1xf32>
      %23 = arith.maximumf %21, %22 : vector<1x1xf32>
      %24 = vector.broadcast %23 : vector<1x1xf32> to vector<1x32xf32>
      %25 = arith.mulf %24, %16 : vector<1x32xf32>
      %26 = arith.addf %14, %25 : vector<1x32xf32>
      %c1 = arith.constant 1 : index
      %c0_19 = arith.constant 0 : index
      %27 = vector.load %arg3[%c1, %c0_19] : memref<6x32xf32, #tpu.memory_space<vmem>>, vector<1x32xf32>
      %c3 = arith.constant 3 : index
      %c0_20 = arith.constant 0 : index
      %28 = vector.load %arg3[%c3, %c0_20] : memref<6x32xf32, #tpu.memory_space<vmem>>, vector<1x32xf32>
      %c5_21 = arith.constant 5 : index
      %c1_22 = arith.constant 1 : index
      %29 = vector.load %arg3[%c5_21, %c1_22] : memref<6x32xf32, #tpu.memory_space<vmem>>, vector<1x1xf32>
      %30 = arith.mulf %13, %27 : vector<1x32xf32>
      %cst_23 = arith.constant dense<0.000000e+00> : vector<1xf32>
      %31 = vector.multi_reduction <add>, %30, %cst_23 [1] : vector<1x32xf32> to vector<1xf32>
      %32 = vector.shape_cast %31 : vector<1xf32> to vector<1x1xf32>
      %33 = arith.addf %32, %29 : vector<1x1xf32>
      %cst_24 = arith.constant 0.000000e+00 : f32
      %34 = vector.broadcast %cst_24 : f32 to vector<1x1xf32>
      %35 = arith.maximumf %33, %34 : vector<1x1xf32>
      %36 = vector.broadcast %35 : vector<1x1xf32> to vector<1x32xf32>
      %37 = arith.mulf %36, %28 : vector<1x32xf32>
      %38 = arith.addf %26, %37 : vector<1x32xf32>
      %c0_25 = arith.constant 0 : index
      %c0_26 = arith.constant 0 : index
      %c0_27 = arith.constant 0 : index
      %39 = vector.load %arg4[%c0_25, %c0_26, %c0_27] : memref<1x1x32xf32, #tpu.memory_space<vmem>>, vector<1x1x32xf32>
      %40 = vector.shape_cast %39 : vector<1x1x32xf32> to vector<1x32xf32>
      %41 = vector.shape_cast %38 : vector<1x32xf32> to vector<1x1x32xf32>
      tpu.vector_store %arg4[%c0_25, %c0_26, %c0_27], %41 {strides = array<i32>} : memref<1x1x32xf32, #tpu.memory_space<vmem>>, vector<1x1x32xf32>,
    } else {
    }
    return
  }
  func.func @transform_0(%arg0: i32, %arg1: i32) -> (i32, i32, i32) {
    %c0_i32 = arith.constant 0 : i32
    %c0_i32_0 = arith.constant 0 : i32
    return %arg0, %c0_i32, %arg1 : i32, i32, i32
  }
  func.func @transform_1(%arg0: i32, %arg1: i32) -> (i32, i32) {
    %c0_i32 = arith.constant 0 : i32
    %c0_i32_0 = arith.constant 0 : i32
    %c0_i32_1 = arith.constant 0 : i32
    return %c0_i32, %c0_i32_0 : i32, i32
  }
  func.func @transform_2(%arg0: i32, %arg1: i32) -> (i32, i32, i32) {
    %c0_i32 = arith.constant 0 : i32
    %c0_i32_0 = arith.constant 0 : i32
    %c0_i32_1 = arith.constant 0 : i32
    return %arg0, %c0_i32, %c0_i32_0 : i32, i32, i32
  }
}

</mosaic_0001>

<llo_original>
// kernel: tpu_custom_call.1
$region0: #{tpu_custom_call.1}
  #allocation0 [shape = 'u32[]', space=smem, size = 0x4, offset = 0x4, fixed_abs, tag = 'smem constant byte address 0x4 - core index']
  #allocation1 [shape = 'u32[144,128]{1,0:T(1,128)}', space=vmem, size = 0x12000, scoped, tag = 'internal scratch']
  #allocation2 [shape = 'f32[1,32]{1,0:T(1,128)}', space=vmem, size = 0x200, scoped, tag = 'scratch operand']
  %s0 = inlined_call_operand.hbm [shape: f32[2,32,256], index: 0, kind: input, shape index: {}]
  %s1 = inlined_call_operand.hbm [shape: f32[6,32], index: 1, kind: input, shape index: {}]
  %s2 = inlined_call_operand.hbm [shape: f32[2,1,32], index: 2, kind: output, shape index: {}]
  %s3 = sld [smem:[#allocation0]]
  $region57: #{tpu_custom_call.1} parent=0
    _
  %s5 = ssub.s32 1, %s3
  %s6 = scalar_select 0, %s5, %s3
  $region1: #{tpu_custom_call.1} parent=0
    #allocation3 [shape = 'u8[65536]{0}', space=vmem, size = 0x10000, scoped, tag = 'input window, operand 0']
    #allocation4 [shape = 's32[2]{0}', space=sflag, size = 0x8, scoped, tag = 'scoped memory for tpu_custom_call.1']
    #allocation5 [shape = 's32[2]{0}', space=sflag, size = 0x8, scoped, tag = 'scoped memory for tpu_custom_call.1']
    #allocation6 [shape = 'u8[4096]{0}', space=vmem, size = 0x1000, scoped, tag = 'input window, operand 1, single buffered']
    #allocation7 [shape = 's32[1]{0}', space=sflag, size = 0x4, scoped, tag = 'scoped memory for tpu_custom_call.1']
    #allocation8 [shape = 'u8[1024]{0}', space=vmem, size = 0x400, scoped, tag = 'output window, operand 0']
    %7 = vsyncpa [#allocation4], 0
    %s8 = scalar_lea.sflag [#allocation4], 1
    %9 = vsyncpa %s8, 0
    %10 = vsyncpa [#allocation7], 0
    %11 = vsyncpa [#allocation5], 0
    %s12 = scalar_lea.sflag [#allocation5], 1
    %13 = vsyncpa %s12, 0
    loop: start=0, step=1, limit=4
    $region2: #{tpu_custom_call.1} parent=1 // loop_pre_header
      _
    $region3: #{tpu_custom_call.1} parent=1 // loop_header
      %s15 = sphi 0, %s19
      %p16 = scmp.ge.s32.totalorder %s15, 4
      %s22 = sphi 0, %s34
      %s23 = sphi 0, %s30
      %s24 = sphi 0, %s22
      %s25 = sphi 0, %s23
      %s26 = sphi 0, %s24
      %s27 = sphi 0, %s25
      %s39 = sphi 0, %s41
      %s42 = sphi 0, %s39
      %s43 = sphi 0, %s42
      %s59 = sphi 0, %s43
      %s63 = sphi 0, %s63
      %s65 = sphi 0, %s63
      %s66 = sphi 0, %s65
      %s80 = sphi 0, %s66
      %s86 = sphi 0, %s88
      %s89 = sphi 0, %s86
      %s90 = sphi 0, %s89
      %s106 = sphi 0, %s90
    $region4: #{tpu_custom_call.1} parent=1 // loop_header_branch
      %18 = sbr.rel (%p16) target = $region8
    $region5: #{tpu_custom_call.1} parent=1 // loop_body
      %s20 = ssub.s32 %s15, 1
      %s21 = ssub.s32 %s15, 2
      %s28 = sadd.s32 1, %s23
      %p29 = scmp.ge.s32.totalorder %s28, 1
      %s30 = scalar_select %p29, 0, %s28
      %s31 = sadd.s32 1, %s22
      %s32 = scalar_select %p29, %s31, %s22
      %p33 = scmp.ge.s32.totalorder %s32, 2
      %s34 = scalar_select %p33, 0, %s32
      %s35 = ssub.s32 %s22, %s34
      %s36 = ssub.s32 %s23, %s30
      %s37 = sor.u32 %s35, %s36
      %p38 = scmp.eq.s32.totalorder %s37, 0
      %s40 = sadd.s32 %s39, 1
      %s41 = scalar_select %p38, %s39, %s40
      %p44 = pneg %p38
      %p45 = scmp.eq.s32.totalorder %s15, 1
      %p46 = por %p44, %p45
      %p47 = scmp.ne.s32.totalorder %s39, %s42
      %p48 = scmp.eq.s32.totalorder %s15, 0
      %p49 = por %p47, %p48
      %p50 = scmp.ne.s32.totalorder %s39, %s42
      %p51 = scmp.eq.s32.totalorder %s20, 1
      %p52 = por %p50, %p51
      %p53 = scmp.ne.s32.totalorder %s42, %s43
      %p54 = scmp.eq.s32.totalorder %s20, 0
      %p55 = por %p53, %p54
      %p56 = scmp.ne.s32.totalorder %s42, %s43
      %p57 = scmp.eq.s32.totalorder %s21, 1
      %p58 = por %p56, %p57
      %p60 = scmp.ne.s32.totalorder %s43, %s59
      %p61 = scmp.eq.s32.totalorder %s21, 0
      %p62 = por %p60, %p61
      %s64 = sadd.s32 %s63, 1
      %p67 = scmp.eq.s32.totalorder %s15, 1
      %p68 = scmp.ne.s32.totalorder %s63, %s65
      %p69 = scmp.eq.s32.totalorder %s15, 0
      %p70 = por %p68, %p69
      %p71 = scmp.ne.s32.totalorder %s63, %s65
      %p72 = scmp.eq.s32.totalorder %s20, 1
      %p73 = por %p71, %p72
      %p74 = scmp.ne.s32.totalorder %s65, %s66
      %p75 = scmp.eq.s32.totalorder %s20, 0
      %p76 = por %p74, %p75
      %p77 = scmp.ne.s32.totalorder %s65, %s66
      %p78 = scmp.eq.s32.totalorder %s21, 1
      %p79 = por %p77, %p78
      %p81 = scmp.ne.s32.totalorder %s66, %s80
      %p82 = scmp.eq.s32.totalorder %s21, 0
      %p83 = por %p81, %p82
      %s84 = ssub.s32 %s22, %s34
      %p85 = scmp.eq.s32.totalorder %s84, 0
      %s87 = sadd.s32 %s86, 1
      %s88 = scalar_select %p85, %s86, %s87
      %p91 = pneg %p85
      %p92 = scmp.eq.s32.totalorder %s15, 1
      %p93 = por %p91, %p92
      %p94 = scmp.ne.s32.totalorder %s86, %s89
      %p95 = scmp.eq.s32.totalorder %s15, 0
      %p96 = por %p94, %p95
      %p97 = scmp.ne.s32.totalorder %s86, %s89
      %p98 = scmp.eq.s32.totalorder %s20, 1
      %p99 = por %p97, %p98
      %p100 = scmp.ne.s32.totalorder %s89, %s90
      %p101 = scmp.eq.s32.totalorder %s20, 0
      %p102 = por %p100, %p101
      %p103 = scmp.ne.s32.totalorder %s89, %s90
      %p104 = scmp.eq.s32.totalorder %s21, 1
      %p105 = por %p103, %p104
      %p107 = scmp.ne.s32.totalorder %s90, %s106
      %p108 = scmp.eq.s32.totalorder %s21, 0
      %p109 = por %p107, %p108
      %p110 = scmp.le.s32.totalorder 1, %s15
      %p111 = scmp.lt.s32.totalorder %s15, 3
      %p112 = pnand %p110, %p111
      %p113 = pneg %p112
      // Predicated region
      $region9: #{tpu_custom_call.1} parent=5 // pred_check
        _
      $region10: #{tpu_custom_call.1} parent=5 // pred_check_branch
        %115 = sbr.rel (%p112) target = $region12
      $region11: #{tpu_custom_call.1} parent=5 // pred_region
        %s116 = ssub.s32 %s15, 1
        // Predicated region
        $region13: #{tpu_custom_call.1} parent=11 // pred_check
          %p117 = pneg %p76
        $region14: #{tpu_custom_call.1} parent=11 // pred_check_branch
          %119 = sbr.rel (%p117) target = $region16
        $region15: #{tpu_custom_call.1} parent=11 // pred_region
          %s121 = ssub.s32 128, 128
          %122 = vsyncadd [#allocation7], %s121
          %s124 = sshll.u32 [#allocation6], 4
          %s125 = int_to_ptr.vmem [resolvable:$true] %s124
          %127 = dma.hbm_to_vmem [thread:$0]  %s1, 128, %s125, [#allocation7]
        $region16: #{tpu_custom_call.1} parent=11 // pred_fallthru
          _
      $region12: #{tpu_custom_call.1} parent=5 // pred_fallthru
        _
      %p128 = scmp.lt.s32.totalorder %s15, 2
      // Predicated region
      $region17: #{tpu_custom_call.1} parent=5 // pred_check
        %p129 = pneg %p128
      $region18: #{tpu_custom_call.1} parent=5 // pred_check_branch
        %131 = sbr.rel (%p129) target = $region20
      $region19: #{tpu_custom_call.1} parent=5 // pred_region
        // Predicated region
        $region21: #{tpu_custom_call.1} parent=19 // pred_check
          %p132 = pneg %p49
        $region22: #{tpu_custom_call.1} parent=19 // pred_check_branch
          %134 = sbr.rel (%p132) target = $region24
        $region23: #{tpu_custom_call.1} parent=19 // pred_region
          %s135 = sand.u32 %s39, 1
          %s136 = scalar_lea.sflag [#allocation4], %s135
          %s137 = sand.u32 %s39, 1
          %s138 = smul.addr %s137, 64
          %s139 = scalar_lea.vmem [#allocation3], %s138
          %s140 = smul.u32 2, %s23
          %s142 = ssub.s32 1024, 1024
          %143 = vsyncadd %s136, %s142
          %s144 = smul.addr %s22, 8
          %s145 = sadd.s32 %s140, %s144
          %s146 = smul.addr %s145, 128
          %s147 = scalar_lea.hbm %s0, %s146
          %s148 = sshll.u32 %s139, 4
          %s149 = int_to_ptr.vmem [resolvable:$true] %s148
          %154 = dma.hbm_to_vmem [thread:$0]  %s147, 1024, %s149, %s136, 256, 256, 16
        $region24: #{tpu_custom_call.1} parent=19 // pred_fallthru
          _
      $region20: #{tpu_custom_call.1} parent=5 // pred_fallthru
        _
      %p155 = scmp.le.s32.totalorder 1, %s15
      %p156 = scmp.lt.s32.totalorder %s15, 3
      %p157 = pnand %p155, %p156
      %p158 = pneg %p157
      // Predicated region
      $region25: #{tpu_custom_call.1} parent=5 // pred_check
        _
      $region26: #{tpu_custom_call.1} parent=5 // pred_check_branch
        %160 = sbr.rel (%p157) target = $region28
      $region27: #{tpu_custom_call.1} parent=5 // pred_region
        %s161 = ssub.s32 %s15, 1
        %s162 = sand.u32 %s42, 1
        %s163 = scalar_lea.sflag [#allocation4], %s162
        %s164 = sand.u32 %s42, 1
        %s165 = smul.addr %s164, 64
        %s166 = scalar_lea.vmem [#allocation3], %s165
        // Predicated region
        $region29: #{tpu_custom_call.1} parent=27 // pred_check
          %p167 = pneg %p55
        $region30: #{tpu_custom_call.1} parent=27 // pred_check_branch
          %169 = sbr.rel (%p167) target = $region32
        $region31: #{tpu_custom_call.1} parent=27 // pred_region
          %170 = dma.done %s163, 1024
        $region32: #{tpu_custom_call.1} parent=27 // pred_fallthru
          _
        // Predicated region
        $region33: #{tpu_custom_call.1} parent=27 // pred_check
          %p171 = pneg %p76
        $region34: #{tpu_custom_call.1} parent=27 // pred_check_branch
          %173 = sbr.rel (%p171) target = $region36
        $region35: #{tpu_custom_call.1} parent=27 // pred_region
          %174 = dma.done [#allocation7], 128
        $region36: #{tpu_custom_call.1} parent=27 // pred_fallthru
          _
        %s175 = sand.u32 %s42, 1
        %s176 = scalar_lea.sflag [#allocation4], %s175
        %s177 = sand.u32 %s42, 1
        %s178 = smul.addr %s177, 64
        %s179 = scalar_lea.vmem [#allocation3], %s178
        %p180 = pneg %p55
        %p181 = pneg %p52
        %p182 = pneg %p76
        %p183 = pneg %p73
        %p184 = pneg %p102
        %p185 = pneg %p99
        %s186 = sand.u32 %s89, 1
        %s187 = scalar_lea.sflag [#allocation5], %s186
        %s188 = sand.u32 %s89, 1
        %s189 = scalar_lea.vmem [#allocation8], %s188
        %s190 = smul.u32 2, %s25
        %p191 = scmp.eq.s32.totalorder %s25, 0
        // Predicated region
        $region37: #{tpu_custom_call.1} parent=27 // pred_check
          %p192 = pneg %p191
        $region38: #{tpu_custom_call.1} parent=27 // pred_check_branch
          %194 = sbr.rel (%p192) target = $region40
        $region39: #{tpu_custom_call.1} parent=27 // pred_region
          %vm195 = vcmask 253952
          %196 = vst.msk [vmem:[#allocation2] sm:$0x1] %vm195, 0.0
        $region40: #{tpu_custom_call.1} parent=27 // pred_fallthru
          _
        %v197 = vld [vmem:[%s166] sm:$0xff]
        %v198 = vld [vmem:[%s166 + $0x8] sm:$0xff]
        %v199 = vld [vmem:[%s166 + $0x10] sm:$0xff]
        %v200 = vld [vmem:[%s166 + $0x18] sm:$0xff]
        %v201 = vld [vmem:[%s166 + $0x20] sm:$0xff]
        %v202 = vld [vmem:[%s166 + $0x28] sm:$0xff]
        %v203 = vld [vmem:[%s166 + $0x30] sm:$0xff]
        %v204 = vld [vmem:[%s166 + $0x38] sm:$0xff]
        %v205 = vld [vmem:[#allocation2] sm:$0x1]
        %v206 = vadd.f32 %v197, %v198
        %207 = vadd.xlane.f32.xlu0 %v206
        %v208 = vpop.xlane.xlu0 %207
        %v209 = vadd.f32 %v199, %v200
        %210 = vadd.xlane.f32.xlu0 %v209
        %v211 = vpop.xlane.xlu0 %210
        %v212 = vadd.f32 %v201, %v202
        %213 = vadd.xlane.f32.xlu0 %v212
        %v214 = vpop.xlane.xlu0 %213
        %v215 = vadd.f32 %v203, %v204
        %216 = vadd.xlane.f32.xlu0 %v215
        %v217 = vpop.xlane.xlu0 %216
        %v222 = vlaneseq
        %v223 = vshrl.u32 %v222, 7
        %v224 = vsub.s32 0, %v223
        %v225 = vrot.slane %v208, %v224
        %v226 = vlaneseq
        %v227 = vshrl.u32 %v226, 7
        %v228 = vsub.s32 1, %v227
        %v229 = vrot.slane %v208, %v228
        %v230 = vlaneseq
        %v231 = vshrl.u32 %v230, 7
        %v232 = vsub.s32 2, %v231
        %v233 = vrot.slane %v208, %v232
        %v234 = vlaneseq
        %v235 = vshrl.u32 %v234, 7
        %v236 = vsub.s32 3, %v235
        %v237 = vrot.slane %v208, %v236
        %v238 = vlaneseq
        %v239 = vshrl.u32 %v238, 7
        %v240 = vsub.s32 4, %v239
        %v241 = vrot.slane %v208, %v240
        %v242 = vlaneseq
        %v243 = vshrl.u32 %v242, 7
        %v244 = vsub.s32 5, %v243
        %v245 = vrot.slane %v208, %v244
        %v246 = vlaneseq
        %v247 = vshrl.u32 %v246, 7
        %v248 = vsub.s32 6, %v247
        %v249 = vrot.slane %v208, %v248
        %v250 = vlaneseq
        %v251 = vshrl.u32 %v250, 7
        %v252 = vsub.s32 7, %v251
        %v253 = vrot.slane %v208, %v252
        %v254 = vlaneseq
        %v255 = vshrl.u32 %v254, 7
        %v256 = vsub.s32 0, %v255
        %v257 = vrot.slane %v211, %v256
        %v258 = vlaneseq
        %v259 = vshrl.u32 %v258, 7
        %v260 = vsub.s32 1, %v259
        %v261 = vrot.slane %v211, %v260
        %v262 = vlaneseq
        %v263 = vshrl.u32 %v262, 7
        %v264 = vsub.s32 2, %v263
        %v265 = vrot.slane %v211, %v264
        %v266 = vlaneseq
        %v267 = vshrl.u32 %v266, 7
        %v268 = vsub.s32 3, %v267
        %v269 = vrot.slane %v211, %v268
        %v270 = vlaneseq
        %v271 = vshrl.u32 %v270, 7
        %v272 = vsub.s32 4, %v271
        %v273 = vrot.slane %v211, %v272
        %v274 = vlaneseq
        %v275 = vshrl.u32 %v274, 7
        %v276 = vsub.s32 5, %v275
        %v277 = vrot.slane %v211, %v276
        %v278 = vlaneseq
        %v279 = vshrl.u32 %v278, 7
        %v280 = vsub.s32 6, %v279
        %v281 = vrot.slane %v211, %v280
        %v282 = vlaneseq
        %v283 = vshrl.u32 %v282, 7
        %v284 = vsub.s32 7, %v283
        %v285 = vrot.slane %v211, %v284
        %v286 = vlaneseq
        %v287 = vshrl.u32 %v286, 7
        %v288 = vsub.s32 0, %v287
        %v289 = vrot.slane %v214, %v288
        %v290 = vlaneseq
        %v291 = vshrl.u32 %v290, 7
        %v292 = vsub.s32 1, %v291
        %v293 = vrot.slane %v214, %v292
        %v294 = vlaneseq
        %v295 = vshrl.u32 %v294, 7
        %v296 = vsub.s32 2, %v295
        %v297 = vrot.slane %v214, %v296
        %v298 = vlaneseq
        %v299 = vshrl.u32 %v298, 7
        %v300 = vsub.s32 3, %v299
        %v301 = vrot.slane %v214, %v300
        %v302 = vlaneseq
        %v303 = vshrl.u32 %v302, 7
        %v304 = vsub.s32 4, %v303
        %v305 = vrot.slane %v214, %v304
        %v306 = vlaneseq
        %v307 = vshrl.u32 %v306, 7
        %v308 = vsub.s32 5, %v307
        %v309 = vrot.slane %v214, %v308
        %v310 = vlaneseq
        %v311 = vshrl.u32 %v310, 7
        %v312 = vsub.s32 6, %v311
        %v313 = vrot.slane %v214, %v312
        %v314 = vlaneseq
        %v315 = vshrl.u32 %v314, 7
        %v316 = vsub.s32 7, %v315
        %v317 = vrot.slane %v214, %v316
        %v318 = vlaneseq
        %v319 = vshrl.u32 %v318, 7
        %v320 = vsub.s32 0, %v319
        %v321 = vrot.slane %v217, %v320
        %v322 = vlaneseq
        %v323 = vshrl.u32 %v322, 7
        %v324 = vsub.s32 1, %v323
        %v325 = vrot.slane %v217, %v324
        %v326 = vlaneseq
        %v327 = vshrl.u32 %v326, 7
        %v328 = vsub.s32 2, %v327
        %v329 = vrot.slane %v217, %v328
        %v330 = vlaneseq
        %v331 = vshrl.u32 %v330, 7
        %v332 = vsub.s32 3, %v331
        %v333 = vrot.slane %v217, %v332
        %v334 = vlaneseq
        %v335 = vshrl.u32 %v334, 7
        %v336 = vsub.s32 4, %v335
        %v337 = vrot.slane %v217, %v336
        %v338 = vlaneseq
        %v339 = vshrl.u32 %v338, 7
        %v340 = vsub.s32 5, %v339
        %v341 = vrot.slane %v217, %v340
        %v342 = vlaneseq
        %v343 = vshrl.u32 %v342, 7
        %v344 = vsub.s32 6, %v343
        %v345 = vrot.slane %v217, %v344
        %v346 = vlaneseq
        %v347 = vshrl.u32 %v346, 7
        %v348 = vsub.s32 7, %v347
        %v349 = vrot.slane %v217, %v348
        %v350 = vcombine.low %v225, %v229
        %v351 = vcombine.low %v233, %v237
        %v352 = vcombine.low %v241, %v245
        %v353 = vcombine.low %v249, %v253
        %v355 = vunpack.c.l.s4 1966171168
        %v356 = vunpack.c.0.s8 %v355
        %v357 = vlaneseq
        %v358 = vshrl.u32 %v357, 7
        %v359 = vsub.s32 %v356, %v358
        %v360 = vrot.slane %v350, %v359
        %v362 = vunpack.c.l.s4 1966171168
        %v363 = vunpack.c.0.s8 %v362
        %v364 = vlaneseq
        %v365 = vshrl.u32 %v364, 7
        %v366 = vsub.s32 %v363, %v365
        %v367 = vrot.slane %v351, %v366
        %v369 = vunpack.c.l.s4 1966171168
        %v370 = vunpack.c.0.s8 %v369
        %v371 = vlaneseq
        %v372 = vshrl.u32 %v371, 7
        %v373 = vsub.s32 %v370, %v372
        %v374 = vrot.slane %v352, %v373
        %v376 = vunpack.c.l.s4 1966171168
        %v377 = vunpack.c.0.s8 %v376
        %v378 = vlaneseq
        %v379 = vshrl.u32 %v378, 7
        %v380 = vsub.s32 %v377, %v379
        %v381 = vrot.slane %v353, %v380
        %v382 = vcombine.low %v360, %v367
        %v383 = vcombine.low %v374, %v381
        %v385 = vunpack.c.l.s4 1966171168
        %v386 = vunpack.c.0.s8 %v385
        %v387 = vlaneseq
        %v388 = vshrl.u32 %v387, 7
        %v389 = vsub.s32 %v386, %v388
        %v390 = vrot.slane %v382, %v389
        %v392 = vunpack.c.l.s4 1966171168
        %v393 = vunpack.c.0.s8 %v392
        %v394 = vlaneseq
        %v395 = vshrl.u32 %v394, 7
        %v396 = vsub.s32 %v393, %v395
        %v397 = vrot.slane %v383, %v396
        %v398 = vcombine.low %v390, %v397
        %v399 = vcombine.low %v257, %v261
        %v400 = vcombine.low %v265, %v269
        %v401 = vcombine.low %v273, %v277
        %v402 = vcombine.low %v281, %v285
        %v404 = vunpack.c.l.s4 1966171168
        %v405 = vunpack.c.0.s8 %v404
        %v406 = vlaneseq
        %v407 = vshrl.u32 %v406, 7
        %v408 = vsub.s32 %v405, %v407
        %v409 = vrot.slane %v399, %v408
        %v411 = vunpack.c.l.s4 1966171168
        %v412 = vunpack.c.0.s8 %v411
        %v413 = vlaneseq
        %v414 = vshrl.u32 %v413, 7
        %v415 = vsub.s32 %v412, %v414
        %v416 = vrot.slane %v400, %v415
        %v418 = vunpack.c.l.s4 1966171168
        %v419 = vunpack.c.0.s8 %v418
        %v420 = vlaneseq
        %v421 = vshrl.u32 %v420, 7
        %v422 = vsub.s32 %v419, %v421
        %v423 = vrot.slane %v401, %v422
        %v425 = vunpack.c.l.s4 1966171168
        %v426 = vunpack.c.0.s8 %v425
        %v427 = vlaneseq
        %v428 = vshrl.u32 %v427, 7
        %v429 = vsub.s32 %v426, %v428
        %v430 = vrot.slane %v402, %v429
        %v431 = vcombine.low %v409, %v416
        %v432 = vcombine.low %v423, %v430
        %v434 = vunpack.c.l.s4 1966171168
        %v435 = vunpack.c.0.s8 %v434
        %v436 = vlaneseq
        %v437 = vshrl.u32 %v436, 7
        %v438 = vsub.s32 %v435, %v437
        %v439 = vrot.slane %v431, %v438
        %v441 = vunpack.c.l.s4 1966171168
        %v442 = vunpack.c.0.s8 %v441
        %v443 = vlaneseq
        %v444 = vshrl.u32 %v443, 7
        %v445 = vsub.s32 %v442, %v444
        %v446 = vrot.slane %v432, %v445
        %v447 = vcombine.low %v439, %v446
        %v448 = vcombine.low %v289, %v293
        %v449 = vcombine.low %v297, %v301
        %v450 = vcombine.low %v305, %v309
        %v451 = vcombine.low %v313, %v317
        %v453 = vunpack.c.l.s4 1966171168
        %v454 = vunpack.c.0.s8 %v453
        %v455 = vlaneseq
        %v456 = vshrl.u32 %v455, 7
        %v457 = vsub.s32 %v454, %v456
        %v458 = vrot.slane %v448, %v457
        %v460 = vunpack.c.l.s4 1966171168
        %v461 = vunpack.c.0.s8 %v460
        %v462 = vlaneseq
        %v463 = vshrl.u32 %v462, 7
        %v464 = vsub.s32 %v461, %v463
        %v465 = vrot.slane %v449, %v464
        %v467 = vunpack.c.l.s4 1966171168
        %v468 = vunpack.c.0.s8 %v467
        %v469 = vlaneseq
        %v470 = vshrl.u32 %v469, 7
        %v471 = vsub.s32 %v468, %v470
        %v472 = vrot.slane %v450, %v471
        %v474 = vunpack.c.l.s4 1966171168
        %v475 = vunpack.c.0.s8 %v474
        %v476 = vlaneseq
        %v477 = vshrl.u32 %v476, 7
        %v478 = vsub.s32 %v475, %v477
        %v479 = vrot.slane %v451, %v478
        %v480 = vcombine.low %v458, %v465
        %v481 = vcombine.low %v472, %v479
        %v483 = vunpack.c.l.s4 1966171168
        %v484 = vunpack.c.0.s8 %v483
        %v485 = vlaneseq
        %v486 = vshrl.u32 %v485, 7
        %v487 = vsub.s32 %v484, %v486
        %v488 = vrot.slane %v480, %v487
        %v490 = vunpack.c.l.s4 1966171168
        %v491 = vunpack.c.0.s8 %v490
        %v492 = vlaneseq
        %v493 = vshrl.u32 %v492, 7
        %v494 = vsub.s32 %v491, %v493
        %v495 = vrot.slane %v481, %v494
        %v496 = vcombine.low %v488, %v495
        %v497 = vcombine.low %v321, %v325
        %v498 = vcombine.low %v329, %v333
        %v499 = vcombine.low %v337, %v341
        %v500 = vcombine.low %v345, %v349
        %v502 = vunpack.c.l.s4 1966171168
        %v503 = vunpack.c.0.s8 %v502
        %v504 = vlaneseq
        %v505 = vshrl.u32 %v504, 7
        %v506 = vsub.s32 %v503, %v505
        %v507 = vrot.slane %v497, %v506
        %v509 = vunpack.c.l.s4 1966171168
        %v510 = vunpack.c.0.s8 %v509
        %v511 = vlaneseq
        %v512 = vshrl.u32 %v511, 7
        %v513 = vsub.s32 %v510, %v512
        %v514 = vrot.slane %v498, %v513
        %v516 = vunpack.c.l.s4 1966171168
        %v517 = vunpack.c.0.s8 %v516
        %v518 = vlaneseq
        %v519 = vshrl.u32 %v518, 7
        %v520 = vsub.s32 %v517, %v519
        %v521 = vrot.slane %v499, %v520
        %v523 = vunpack.c.l.s4 1966171168
        %v524 = vunpack.c.0.s8 %v523
        %v525 = vlaneseq
        %v526 = vshrl.u32 %v525, 7
        %v527 = vsub.s32 %v524, %v526
        %v528 = vrot.slane %v500, %v527
        %v529 = vcombine.low %v507, %v514
        %v530 = vcombine.low %v521, %v528
        %v532 = vunpack.c.l.s4 1966171168
        %v533 = vunpack.c.0.s8 %v532
        %v534 = vlaneseq
        %v535 = vshrl.u32 %v534, 7
        %v536 = vsub.s32 %v533, %v535
        %v537 = vrot.slane %v529, %v536
        %v539 = vunpack.c.l.s4 1966171168
        %v540 = vunpack.c.0.s8 %v539
        %v541 = vlaneseq
        %v542 = vshrl.u32 %v541, 7
        %v543 = vsub.s32 %v540, %v542
        %v544 = vrot.slane %v530, %v543
        %v545 = vcombine.low %v537, %v544
        %546 = vset.pattern.permute.xlu0 0
        %547 = vperm.xlu0 %546, %v398
        %v548 = vpop.permute.xlu0 %547
        %549 = vset.pattern.permute.xlu0 0
        %550 = vperm.xlu0 %549, %v447
        %v551 = vpop.permute.xlu0 %550
        %552 = vset.pattern.permute.xlu0 0
        %553 = vperm.xlu0 %552, %v496
        %v554 = vpop.permute.xlu0 %553
        %555 = vset.pattern.permute.xlu0 0
        %556 = vperm.xlu0 %555, %v545
        %v557 = vpop.permute.xlu0 %556
        %v558 = vlaneseq
        %v559 = vand.u32 %v558, 127
        %v560 = vlaneseq
        %v561 = vshrl.u32 %v560, 7
        %v562 = vsub.s32 %v559, %v561
        %v563 = vrot.slane %v548, %v562
        %v564 = vadd.s32 %v559, 4294967288
        %v565 = vlaneseq
        %v566 = vshrl.u32 %v565, 7
        %v567 = vsub.s32 %v564, %v566
        %v568 = vrot.slane %v551, %v567
        %vm569 = vcmask 130112
        %v570 = vsel %vm569, %v568, %v563
        %v571 = vadd.s32 %v559, 4294967280
        %v572 = vlaneseq
        %v573 = vshrl.u32 %v572, 7
        %v574 = vsub.s32 %v571, %v573
        %v575 = vrot.slane %v554, %v574
        %vm576 = vcmask 195712
        %v577 = vsel %vm576, %v575, %v570
        %v578 = vadd.s32 %v559, 4294967272
        %v579 = vlaneseq
        %v580 = vshrl.u32 %v579, 7
        %v581 = vsub.s32 %v578, %v580
        %v582 = vrot.slane %v557, %v581
        %vm583 = vcmask 261312
        %v584 = vsel %vm583, %v582, %v577
        %v586 = vunpack.c.l.s4 1966171168
        %v587 = vunpack.c.0.s8 %v586
        %v588 = vlaneseq
        %v589 = vshrl.u32 %v588, 7
        %v590 = vsub.s32 %v587, %v589
        %v591 = vrot.slane %v584, %v590
        %v593 = vunpack.c.l.s4 1966171168
        %v594 = vunpack.c.0.s8 %v593
        %v595 = vlaneseq
        %v596 = vshrl.u32 %v595, 7
        %v597 = vsub.s32 %v594, %v596
        %v598 = vrot.slane %v591, %v597
        %v600 = vadd.f32 %v205, %v598
        %vm601 = vcmask 253952
        %602 = vst.msk [vmem:[#allocation2] sm:$0x1] %vm601, %v600
        // Predicated region
        $region41: #{tpu_custom_call.1} parent=27 // pred_check
          %p603 = pneg %p191
        $region42: #{tpu_custom_call.1} parent=27 // pred_check_branch
          %605 = sbr.rel (%p603) target = $region44
        $region43: #{tpu_custom_call.1} parent=27 // pred_region
          %v606 = vld [vmem:[#allocation2] sm:$0x1]
          %v607 = vmul.f32 %v606, 0.00390625
          %v608 = vld [vmem:[#allocation6 + $0x4] sm:$0x1]
          %v609 = vld [vmem:[#allocation6] sm:$0x1]
          %v610 = vld [vmem:[#allocation6 + $0x2] sm:$0x1]
          %v611 = vld [vmem:[#allocation6 + $0x5] sm:$0x1]
          %v612 = vmul.f32 %v607, %v609
          %v613 = vsel %vm601, %v612, 0.0
          %614 = vadd.xlane.f32.xlu0 %v613
          %v615 = vpop.xlane.xlu0 %614
          %v616 = vadd.f32 %v615, %v611
          %v617 = vmax.f32 %v616, 0.0
          %619 = vset.pattern.permute.xlu0 0
          %620 = vperm.xlu0 %619, %v617
          %v621 = vpop.permute.xlu0 %620
          %v623 = vmul.f32 %v621, %v610
          %v624 = vadd.f32 %v608, %v623
          %v625 = vld [vmem:[#allocation6 + $0x1] sm:$0x1]
          %v626 = vld [vmem:[#allocation6 + $0x3] sm:$0x1]
          %v627 = vmul.f32 %v607, %v625
          %v628 = vsel %vm601, %v627, 0.0
          %629 = vadd.xlane.f32.xlu0 %v628
          %v630 = vpop.xlane.xlu0 %629
          %v631 = vadd.f32 %v630, %v611
          %v632 = vmax.f32 %v631, 0.0
          %634 = vset.pattern.permute.xlu0 1
          %635 = vperm.xlu0 %634, %v632
          %v636 = vpop.permute.xlu0 %635
          %v638 = vmul.f32 %v636, %v626
          %v639 = vadd.f32 %v624, %v638
          %640 = vst.msk [vmem:[%s189] sm:$0x1] %vm601, %v639
        $region44: #{tpu_custom_call.1} parent=27 // pred_fallthru
          _
        %s641 = sand.u32 %s89, 1
        %s642 = scalar_lea.sflag [#allocation5], %s641
        %s643 = sand.u32 %s89, 1
        %s644 = scalar_lea.vmem [#allocation8], %s643
        // Predicated region
        $region45: #{tpu_custom_call.1} parent=27 // pred_check
          %p645 = pneg %p99
        $region46: #{tpu_custom_call.1} parent=27 // pred_check_branch
          %647 = sbr.rel (%p645) target = $region48
        $region47: #{tpu_custom_call.1} parent=27 // pred_region
          %s649 = ssub.s32 16, 16
          %650 = vsyncadd %s642, %s649
          %s651 = smul.addr %s24, 16
          %s652 = scalar_lea.hbm %s2, %s651
          %s654 = sshll.u32 %s644, 4
          %s655 = int_to_ptr.vmem [resolvable:$true] %s654
          %657 = dma.vmem_to_hbm [thread:$0]  %s655, 16, %s652, %s642
        $region48: #{tpu_custom_call.1} parent=27 // pred_fallthru
          _
      $region28: #{tpu_custom_call.1} parent=5 // pred_fallthru
        _
      %p658 = scmp.le.s32.totalorder 2, %s15
      // Predicated region
      $region49: #{tpu_custom_call.1} parent=5 // pred_check
        %p659 = pneg %p658
      $region50: #{tpu_custom_call.1} parent=5 // pred_check_branch
        %661 = sbr.rel (%p659) target = $region52
      $region51: #{tpu_custom_call.1} parent=5 // pred_region
        %s662 = ssub.s32 %s15, 2
        // Predicated region
        $region53: #{tpu_custom_call.1} parent=51 // pred_check
          %p663 = pneg %p105
        $region54: #{tpu_custom_call.1} parent=51 // pred_check_branch
          %665 = sbr.rel (%p663) target = $region56
        $region55: #{tpu_custom_call.1} parent=51 // pred_region
          %s666 = sand.u32 %s90, 1
          %s667 = scalar_lea.sflag [#allocation5], %s666
          %s668 = sand.u32 %s90, 1
          %s669 = scalar_lea.vmem [#allocation8], %s668
          %670 = dma.done %s667, 16
        $region56: #{tpu_custom_call.1} parent=51 // pred_fallthru
          _
      $region52: #{tpu_custom_call.1} parent=5 // pred_fallthru
        _
    $region6: #{tpu_custom_call.1} parent=1 // loop_footer
      %s19 = sadd.s32 1, %s15
    $region7: #{tpu_custom_call.1} parent=1 // loop_footer_branch
      %14 = sbr.rel target = $region3
    $region8: #{tpu_custom_call.1} parent=1 // loop_exit
      _
    %671 = vsyncpa [#allocation4], 1
    %s672 = scalar_lea.sflag [#allocation4], 1
    %673 = vsyncpa %s672, 1
    %674 = vsyncpa [#allocation7], 1
    %675 = vsyncpa [#allocation5], 1
    %s676 = scalar_lea.sflag [#allocation5], 1
    %677 = vsyncpa %s676, 1

</llo_original>
